<compile_context>
chip_gen: v7x
topology: tpu7x:2x2x1
jax: 0.10.0
libtpu: 0.0.40
codegen_flags: <defaults>
</compile_context>

<pallas_src>
import jax
import jax.numpy as jnp
from jax import lax
from jax.experimental import pallas as pl
from jax.experimental.pallas import tpu as pltpu


def _round_up(x, m):
    return ((x + m - 1) // m) * m


def _choose_row_tile(n_rows, h_pad):
    """Largest row tile whose double-buffered activation footprint stays modest.

    Budget ~24 MiB for 3 inputs x 2 buffers x T x Hp x 4B keeps total VMEM use well
    under 64 MiB (v7x physical cap) while staying near the measured ~85% HBM roofline
    (tile >= 512 rows for typical H).
    """
    act_budget = 24 * 1024 * 1024
    t = 1024
    while t > 128 and 3 * 2 * t * h_pad * 4 > act_budget:
        t //= 2
    rows8 = _round_up(n_rows, 8)
    if rows8 <= t:  # small problem: a single tile covering all (padded) rows
        t = rows8
    return t


def _disc2_kernel(hpl_ref, hmi_ref, c_ref, w_ref, b_ref, out_ref):
    """One row-tile of the bilinear discriminator.

    hpl_ref, hmi_ref, c_ref : (T, Hp)   f32 VMEM
    w_ref                   : (Hp, Hp)  f32 VMEM (resident across the grid)
    b_ref                   : (1,)      f32 SMEM
    out_ref                 : (1, 2, T) f32 VMEM (lane-dense rows: [sc1; sc2])
    """
    # cw[r, i] = sum_j c[r, j] * W[i, j]  -- single 2-D MXU matmul shared by both scores.
    cw = lax.dot_general(
        c_ref[...], w_ref[...],
        dimension_numbers=(((1,), (1,)), ((), ())),
        preferred_element_type=jnp.float32,
    )  # (T, Hp)

    bias = b_ref[0]

    # Row-wise dot products. Keep intermediates >= 2-D so the lane-reduce result lands
    # directly as a lane-dense (1, T) row for an unmasked, aligned store.
    p1 = (hpl_ref[...].astype(jnp.float32) * cw)[None]  # (1, T, Hp)
    p2 = (hmi_ref[...].astype(jnp.float32) * cw)[None]  # (1, T, Hp)
    sc1 = jnp.sum(p1, axis=-1) + bias                   # (1, T)
    sc2 = jnp.sum(p2, axis=-1) + bias                   # (1, T)

    out_ref[0, 0:1, :] = sc1
    out_ref[0, 1:2, :] = sc2


def discriminator2_forward(c, h_pl, h_mi, weight, bias, s_bias1=None, s_bias2=None):
    """c, h_pl, h_mi: (B, N, H). weight: (H, H). bias: (1,). Returns (B, 2N) f32."""
    B, N, H = c.shape
    rows = B * N
    Hp = _round_up(H, 128)
    T = _choose_row_tile(rows, Hp)
    R_pad = _round_up(rows, T)
    num_tiles = R_pad // T

    def prep(x):
        x2 = x.reshape(rows, H).astype(jnp.float32)
        return jnp.pad(x2, ((0, R_pad - rows), (0, Hp - H)))

    hpl2 = prep(h_pl)
    hmi2 = prep(h_mi)
    c2 = prep(c)
    w2 = jnp.pad(weight.astype(jnp.float32), ((0, Hp - H), (0, Hp - H)))
    b1 = bias.reshape(1).astype(jnp.float32)

    # VMEM budget: double-buffered activation tiles + resident weight + output buffers.
    vmem_bytes = (3 * 2 * T * Hp * 4) + (2 * Hp * Hp * 4) + (2 * 2 * 2 * T * 4) + (4 << 20)
    vmem_limit = int(min(max(vmem_bytes, 16 << 20), 64 << 20))

    out = pl.pallas_call(
        _disc2_kernel,
        out_shape=jax.ShapeDtypeStruct((num_tiles, 2, T), jnp.float32),
        grid=(num_tiles,),
        in_specs=[
            pl.BlockSpec((T, Hp), lambda i: (i, 0)),            # h_pl tile
            pl.BlockSpec((T, Hp), lambda i: (i, 0)),            # h_mi tile
            pl.BlockSpec((T, Hp), lambda i: (i, 0)),            # c tile
            pl.BlockSpec((Hp, Hp), lambda i: (0, 0)),           # weight (resident)
            pl.BlockSpec(memory_space=pltpu.MemorySpace.SMEM),  # bias scalar
        ],
        out_specs=pl.BlockSpec((1, 2, T), lambda i: (i, 0, 0)),
        compiler_params=pltpu.CompilerParams(
            dimension_semantics=("parallel",),
            vmem_limit_bytes=vmem_limit,
        ),
    )(hpl2, hmi2, c2, w2, b1)

    # Wrapper glue: (num_tiles, 2, T) -> (2, B*N) -> (B, 2N), dropping row padding.
    sc = jnp.transpose(out, (1, 0, 2)).reshape(2, R_pad)[:, :rows]
    sc1 = sc[0].reshape(B, N)
    sc2 = sc[1].reshape(B, N)
    if s_bias1 is not None:
        sc1 = sc1 + s_bias1
    if s_bias2 is not None:
        sc2 = sc2 + s_bias2
    return jnp.concatenate([sc1, sc2], axis=1)


def init_params(key, n_h):
    """Deterministic init matching the module: xavier_uniform weight, zero bias."""
    # torch xavier_uniform_ on (1, n_h, n_h): fan_in = n_h*n_h, fan_out = 1*n_h
    fan_in = n_h * n_h
    fan_out = n_h
    bound = (6.0 / (fan_in + fan_out)) ** 0.5
    weight = jax.random.uniform(key, (n_h, n_h), jnp.float32, -bound, bound)
    bias = jnp.zeros((1,), jnp.float32)
    return weight, bias


if __name__ == "__main__":
    B, N, H = 2, 8, 32  # batch, nodes, hidden (n_h)

    root = jax.random.PRNGKey(0)
    k_w, k_c, k_pl, k_mi = jax.random.split(root, 4)

    weight, bias = init_params(k_w, H)
    c = jax.random.normal(k_c, (B, N, H), jnp.float32)
    h_pl = jax.random.normal(k_pl, (B, N, H), jnp.float32)
    h_mi = jax.random.normal(k_mi, (B, N, H), jnp.float32)

    logits = discriminator2_forward(c, h_pl, h_mi, weight, bias)
    logits = jax.block_until_ready(logits)

    # Pure-JAX reference for verification.
    cw_ref = jnp.einsum("bnj,ij->bni", c, weight)
    sc1_ref = jnp.sum(h_pl * cw_ref, axis=-1) + bias[0]
    sc2_ref = jnp.sum(h_mi * cw_ref, axis=-1) + bias[0]
    ref = jnp.concatenate([sc1_ref, sc2_ref], axis=1)

    assert logits.shape == (B, 2 * N)
    assert jnp.allclose(logits, ref, atol=1e-4, rtol=1e-4)

    print("KERNEL_OK")
</pallas_src>

<mosaic_0001>
module attributes {stable_mosaic.version = 11 : i64} {
  func.func @_disc2_kernel(%arg0: i32, %arg1: memref<16x128xf32, #tpu.memory_space<vmem>>, %arg2: memref<16x128xf32, #tpu.memory_space<vmem>>, %arg3: memref<16x128xf32, #tpu.memory_space<vmem>>, %arg4: memref<128x128xf32, #tpu.memory_space<vmem>>, %arg5: memref<1xf32, #tpu.memory_space<smem>>, %arg6: memref<1x2x16xf32, #tpu.memory_space<vmem>>) attributes {dimension_semantics = [#tpu.dimension_semantics<parallel>], iteration_bounds = array<i64: 1>, scalar_prefetch = 0 : i64, scratch_operands = 0 : i64, tpu.core_type = #tpu.core_type<tc>, window_params = [{transform_indices = @transform_0, window_bounds = array<i64: 16, 128>}, {transform_indices = @transform_1, window_bounds = array<i64: 16, 128>}, {transform_indices = @transform_2, window_bounds = array<i64: 16, 128>}, {pipeline_mode = #tpu.pipeline_mode<synchronous>, transform_indices = @transform_3, window_bounds = array<i64: 128, 128>}, {transform_indices = @transform_4, window_bounds = array<i64: 1>}, {transform_indices = @transform_5, window_bounds = array<i64: 1, 2, 16>}]} {
    %c0 = arith.constant 0 : index
    %c0_0 = arith.constant 0 : index
    %0 = vector.load %arg3[%c0, %c0_0] : memref<16x128xf32, #tpu.memory_space<vmem>>, vector<16x128xf32>
    %c0_1 = arith.constant 0 : index
    %c0_2 = arith.constant 0 : index
    %1 = vector.load %arg4[%c0_1, %c0_2] : memref<128x128xf32, #tpu.memory_space<vmem>>, vector<128x128xf32>
    %cst = arith.constant dense<0.000000e+00> : vector<16x128xf32>
    %2 = tpu.matmul %0, %1, %cst {dimension_numbers = #tpu.dot_dimension_numbers<[1], [1], [0], [0], [0, 0, 1, 0], [], []>} : vector<16x128xf32>, vector<128x128xf32>, vector<16x128xf32> -> vector<16x128xf32>
    %c0_3 = arith.constant 0 : index
    %3 = memref.load %arg5[%c0_3] : memref<1xf32, #tpu.memory_space<smem>>
    %c0_4 = arith.constant 0 : index
    %c0_5 = arith.constant 0 : index
    %4 = vector.load %arg1[%c0_4, %c0_5] : memref<16x128xf32, #tpu.memory_space<vmem>>, vector<16x128xf32>
    %5 = arith.mulf %4, %2 : vector<16x128xf32>
    %6 = vector.shape_cast %5 : vector<16x128xf32> to vector<1x16x128xf32>
    %c0_6 = arith.constant 0 : index
    %c0_7 = arith.constant 0 : index
    %7 = vector.load %arg2[%c0_6, %c0_7] : memref<16x128xf32, #tpu.memory_space<vmem>>, vector<16x128xf32>
    %8 = arith.mulf %7, %2 : vector<16x128xf32>
    %9 = vector.shape_cast %8 : vector<16x128xf32> to vector<1x16x128xf32>
    %cst_8 = arith.constant dense<0.000000e+00> : vector<1x16xf32>
    %10 = vector.multi_reduction <add>, %6, %cst_8 [2] : vector<1x16x128xf32> to vector<1x16xf32>
    %11 = vector.broadcast %3 : f32 to vector<1x16xf32>
    %12 = arith.addf %10, %11 : vector<1x16xf32>
    %cst_9 = arith.constant dense<0.000000e+00> : vector<1x16xf32>
    %13 = vector.multi_reduction <add>, %9, %cst_9 [2] : vector<1x16x128xf32> to vector<1x16xf32>
    %14 = vector.broadcast %3 : f32 to vector<1x16xf32>
    %15 = arith.addf %13, %14 : vector<1x16xf32>
    %c0_10 = arith.constant 0 : index
    %c0_11 = arith.constant 0 : index
    %c0_12 = arith.constant 0 : index
    %16 = vector.load %arg6[%c0_10, %c0_11, %c0_12] : memref<1x2x16xf32, #tpu.memory_space<vmem>>, vector<1x1x16xf32>
    %17 = vector.shape_cast %16 : vector<1x1x16xf32> to vector<1x16xf32>
    %18 = vector.shape_cast %12 : vector<1x16xf32> to vector<1x1x16xf32>
    tpu.vector_store %arg6[%c0_10, %c0_11, %c0_12], %18 {strides = array<i32>} : memref<1x2x16xf32, #tpu.memory_space<vmem>>, vector<1x1x16xf32>,
    %c0_13 = arith.constant 0 : index
    %c1 = arith.constant 1 : index
    %c0_14 = arith.constant 0 : index
    %19 = vector.load %arg6[%c0_13, %c1, %c0_14] : memref<1x2x16xf32, #tpu.memory_space<vmem>>, vector<1x1x16xf32>
    %20 = vector.shape_cast %19 : vector<1x1x16xf32> to vector<1x16xf32>
    %21 = vector.shape_cast %15 : vector<1x16xf32> to vector<1x1x16xf32>
    tpu.vector_store %arg6[%c0_13, %c1, %c0_14], %21 {strides = array<i32>} : memref<1x2x16xf32, #tpu.memory_space<vmem>>, vector<1x1x16xf32>,
    return
  }
  func.func @transform_0(%arg0: i32) -> (i32, i32) {
    %c0_i32 = arith.constant 0 : i32
    %c0_i32_0 = arith.constant 0 : i32
    return %arg0, %c0_i32 : i32, i32
  }
  func.func @transform_1(%arg0: i32) -> (i32, i32) {
    %c0_i32 = arith.constant 0 : i32
    %c0_i32_0 = arith.constant 0 : i32
    return %arg0, %c0_i32 : i32, i32
  }
  func.func @transform_2(%arg0: i32) -> (i32, i32) {
    %c0_i32 = arith.constant 0 : i32
    %c0_i32_0 = arith.constant 0 : i32
    return %arg0, %c0_i32 : i32, i32
  }
  func.func @transform_3(%arg0: i32) -> (i32, i32) {
    %c0_i32 = arith.constant 0 : i32
    %c0_i32_0 = arith.constant 0 : i32
    %c0_i32_1 = arith.constant 0 : i32
    return %c0_i32, %c0_i32_0 : i32, i32
  }
  func.func @transform_4(%arg0: i32) -> i32 {
    %c0_i32 = arith.constant 0 : i32
    %c0_i32_0 = arith.constant 0 : i32
    return %c0_i32 : i32
  }
  func.func @transform_5(%arg0: i32) -> (i32, i32, i32) {
    %c0_i32 = arith.constant 0 : i32
    %c0_i32_0 = arith.constant 0 : i32
    %c0_i32_1 = arith.constant 0 : i32
    return %arg0, %c0_i32, %c0_i32_0 : i32, i32, i32
  }
}

</mosaic_0001>

<llo_original>
// kernel: tpu_custom_call.1
$region0: #{tpu_custom_call.1}
  #allocation0 [shape = 'u32[]', space=smem, size = 0x4, offset = 0x4, fixed_abs, tag = 'smem constant byte address 0x4 - core index']
  #allocation1 [shape = 'u32[144,128]{1,0:T(1,128)}', space=vmem, size = 0x12000, scoped, tag = 'internal scratch']
  #allocation2 [shape = 'f32[1]{0:T(128)S(6)}', space=smem, size = 0x200, scoped, tag = 'scoped memory for tpu_custom_call.1']
  %s0 = inlined_call_operand.hbm [shape: f32[16,128], index: 0, kind: input, shape index: {}]
  %s1 = inlined_call_operand.hbm [shape: f32[16,128], index: 1, kind: input, shape index: {}]
  %s2 = inlined_call_operand.hbm [shape: f32[16,128], index: 2, kind: input, shape index: {}]
  %s3 = inlined_call_operand.hbm [shape: f32[128,128], index: 3, kind: input, shape index: {}]
  %s4 = inlined_call_operand.<no memory space> [shape: f32[1], index: 4, kind: input, shape index: {}]
  %s5 = inlined_call_operand.hbm [shape: f32[1,2,16], index: 5, kind: output, shape index: {}]
  %s6 = sld [smem:[#allocation0]]
  $region46: #{tpu_custom_call.1} parent=0
    _
  %s8 = ssub.s32 1, %s6
  %s9 = scalar_select 0, %s8, %s6
  %10 = sst [smem:[#allocation2]] %s4
  $region1: #{tpu_custom_call.1} parent=0
    #allocation3 [shape = 'u8[8192]{0}', space=vmem, size = 0x2000, scoped, tag = 'input window, operand 0, single buffered']
    #allocation4 [shape = 's32[1]{0}', space=sflag, size = 0x4, scoped, tag = 'scoped memory for tpu_custom_call.1']
    #allocation5 [shape = 's32[1]{0}', space=sflag, size = 0x4, scoped, tag = 'scoped memory for tpu_custom_call.1']
    #allocation6 [shape = 'u8[8192]{0}', space=vmem, size = 0x2000, scoped, tag = 'input window, operand 1, single buffered']
    #allocation7 [shape = 's32[1]{0}', space=sflag, size = 0x4, scoped, tag = 'scoped memory for tpu_custom_call.1']
    #allocation8 [shape = 'u8[8192]{0}', space=vmem, size = 0x2000, scoped, tag = 'input window, operand 2, single buffered']
    #allocation9 [shape = 'u8[65536]{0}', space=vmem, size = 0x10000, scoped, tag = 'input window, operand 3, single buffered']
    #allocation10 [shape = 's32[1]{0}', space=sflag, size = 0x4, scoped, tag = 'scoped memory for tpu_custom_call.1']
    #allocation11 [shape = 'u8[1024]{0}', space=vmem, size = 0x400, scoped, tag = 'output window, operand 0, single buffered']
    %11 = vsyncpa [#allocation4], 0
    %12 = vsyncpa [#allocation7], 0
    %13 = vsyncpa [#allocation10], 0
    %14 = vsyncpa [#allocation5], 0
    // Predicated region
    $region2: #{tpu_custom_call.1} parent=1 // pred_check
      _
    $region3: #{tpu_custom_call.1} parent=1 // pred_check_branch
      %16 = sbr.rel (0) target = $region5
    $region4: #{tpu_custom_call.1} parent=1 // pred_region
      %s18 = ssub.s32 256, 256
      %19 = vsyncadd [#allocation4], %s18
      %s20 = sshll.u32 [#allocation3], 4
      %s21 = int_to_ptr.vmem [resolvable:$true] %s20
      %26 = dma.hbm_to_vmem [thread:$0]  %s0, 256, %s21, [#allocation4], 128, 128, 8
    $region5: #{tpu_custom_call.1} parent=1 // pred_fallthru
      _
    // Predicated region
    $region6: #{tpu_custom_call.1} parent=1 // pred_check
      _
    $region7: #{tpu_custom_call.1} parent=1 // pred_check_branch
      %28 = sbr.rel (0) target = $region9
    $region8: #{tpu_custom_call.1} parent=1 // pred_region
      %s30 = ssub.s32 256, 256
      %31 = vsyncadd [#allocation7], %s30
      %s32 = sshll.u32 [#allocation6], 4
      %s33 = int_to_ptr.vmem [resolvable:$true] %s32
      %38 = dma.hbm_to_vmem [thread:$0]  %s1, 256, %s33, [#allocation7], 128, 128, 8
    $region9: #{tpu_custom_call.1} parent=1 // pred_fallthru
      _
    // Predicated region
    $region10: #{tpu_custom_call.1} parent=1 // pred_check
      _
    $region11: #{tpu_custom_call.1} parent=1 // pred_check_branch
      %40 = sbr.rel (0) target = $region13
    $region12: #{tpu_custom_call.1} parent=1 // pred_region
      %s42 = ssub.s32 256, 256
      %43 = vsyncadd [#allocation7], %s42
      %s44 = sshll.u32 [#allocation8], 4
      %s45 = int_to_ptr.vmem [resolvable:$true] %s44
      %50 = dma.hbm_to_vmem [thread:$0]  %s2, 256, %s45, [#allocation7], 128, 128, 8
    $region13: #{tpu_custom_call.1} parent=1 // pred_fallthru
      _
    // Predicated region
    $region14: #{tpu_custom_call.1} parent=1 // pred_check
      _
    $region15: #{tpu_custom_call.1} parent=1 // pred_check_branch
      %52 = sbr.rel (0) target = $region17
    $region16: #{tpu_custom_call.1} parent=1 // pred_region
      %s54 = ssub.s32 2048, 2048
      %55 = vsyncadd [#allocation10], %s54
      %s56 = sshll.u32 [#allocation9], 4
      %s57 = int_to_ptr.vmem [resolvable:$true] %s56
      %62 = dma.hbm_to_vmem [thread:$0]  %s3, 2048, %s57, [#allocation10], 128, 128, 8
    $region17: #{tpu_custom_call.1} parent=1 // pred_fallthru
      _
    // Predicated region
    $region18: #{tpu_custom_call.1} parent=1 // pred_check
      _
    $region19: #{tpu_custom_call.1} parent=1 // pred_check_branch
      %64 = sbr.rel (0) target = $region21
    $region20: #{tpu_custom_call.1} parent=1 // pred_region
      _
    $region21: #{tpu_custom_call.1} parent=1 // pred_fallthru
      _
    // Predicated region
    $region22: #{tpu_custom_call.1} parent=1 // pred_check
      _
    $region23: #{tpu_custom_call.1} parent=1 // pred_check_branch
      %66 = sbr.rel (0) target = $region25
    $region24: #{tpu_custom_call.1} parent=1 // pred_region
      %67 = dma.done [#allocation4], 256
    $region25: #{tpu_custom_call.1} parent=1 // pred_fallthru
      _
    // Predicated region
    $region26: #{tpu_custom_call.1} parent=1 // pred_check
      _
    $region27: #{tpu_custom_call.1} parent=1 // pred_check_branch
      %69 = sbr.rel (0) target = $region29
    $region28: #{tpu_custom_call.1} parent=1 // pred_region
      %70 = dma.done [#allocation7], 256
    $region29: #{tpu_custom_call.1} parent=1 // pred_fallthru
      _
    // Predicated region
    $region30: #{tpu_custom_call.1} parent=1 // pred_check
      _
    $region31: #{tpu_custom_call.1} parent=1 // pred_check_branch
      %72 = sbr.rel (0) target = $region33
    $region32: #{tpu_custom_call.1} parent=1 // pred_region
      %73 = dma.done [#allocation7], 256
    $region33: #{tpu_custom_call.1} parent=1 // pred_fallthru
      _
    // Predicated region
    $region34: #{tpu_custom_call.1} parent=1 // pred_check
      _
    $region35: #{tpu_custom_call.1} parent=1 // pred_check_branch
      %75 = sbr.rel (0) target = $region37
    $region36: #{tpu_custom_call.1} parent=1 // pred_region
      %76 = dma.done [#allocation10], 2048
    $region37: #{tpu_custom_call.1} parent=1 // pred_fallthru
      _
    %v77 = vld [vmem:[#allocation8] sm:$0xff]
    %v78 = vld [vmem:[#allocation8 + $0x8] sm:$0xff]
    %v79 = vld [vmem:[#allocation9] sm:$0xff]
    %v80 = vld [vmem:[#allocation9 + $0x8] sm:$0xff]
    %v81 = vld [vmem:[#allocation9 + $0x10] sm:$0xff]
    %v82 = vld [vmem:[#allocation9 + $0x18] sm:$0xff]
    %v83 = vld [vmem:[#allocation9 + $0x20] sm:$0xff]
    %v84 = vld [vmem:[#allocation9 + $0x28] sm:$0xff]
    %v85 = vld [vmem:[#allocation9 + $0x30] sm:$0xff]
    %v86 = vld [vmem:[#allocation9 + $0x38] sm:$0xff]
    %v87 = vld [vmem:[#allocation9 + $0x40] sm:$0xff]
    %v88 = vld [vmem:[#allocation9 + $0x48] sm:$0xff]
    %v89 = vld [vmem:[#allocation9 + $0x50] sm:$0xff]
    %v90 = vld [vmem:[#allocation9 + $0x58] sm:$0xff]
    %v91 = vld [vmem:[#allocation9 + $0x60] sm:$0xff]
    %v92 = vld [vmem:[#allocation9 + $0x68] sm:$0xff]
    %v93 = vld [vmem:[#allocation9 + $0x70] sm:$0xff]
    %v94 = vld [vmem:[#allocation9 + $0x78] sm:$0xff]
    %95 = vmatprep.subr.mxu0 0.0
    %96 = vmatpush1.xpose.msra.mxu0 %v79
    %97 = vmatprep.subr.mxu0 0.0
    %98 = vmatpush1.xpose.msra.mxu0 %v80
    %99 = vmatprep.subr.mxu0 0.0
    %100 = vmatpush1.xpose.msra.mxu0 %v81
    %101 = vmatprep.subr.mxu0 0.0
    %102 = vmatpush1.xpose.msra.mxu0 %v82
    %103 = vmatprep.subr.mxu0 0.0
    %104 = vmatpush1.xpose.msra.mxu0 %v83
    %105 = vmatprep.subr.mxu0 0.0
    %106 = vmatpush1.xpose.msra.mxu0 %v84
    %107 = vmatprep.subr.mxu0 0.0
    %108 = vmatpush1.xpose.msra.mxu0 %v85
    %109 = vmatprep.subr.mxu0 0.0
    %110 = vmatpush1.xpose.msra.mxu0 %v86
    %111 = vmatprep.subr.mxu0 0.0
    %112 = vmatpush1.xpose.msra.mxu0 %v87
    %113 = vmatprep.subr.mxu0 0.0
    %114 = vmatpush1.xpose.msra.mxu0 %v88
    %115 = vmatprep.subr.mxu0 0.0
    %116 = vmatpush1.xpose.msra.mxu0 %v89
    %117 = vmatprep.subr.mxu0 0.0
    %118 = vmatpush1.xpose.msra.mxu0 %v90
    %119 = vmatprep.subr.mxu0 0.0
    %120 = vmatpush1.xpose.msra.mxu0 %v91
    %121 = vmatprep.subr.mxu0 0.0
    %122 = vmatpush1.xpose.msra.mxu0 %v92
    %123 = vmatprep.subr.mxu0 0.0
    %124 = vmatpush1.xpose.msra.mxu0 %v93
    %125 = vmatprep.subr.mxu0 0.0
    %126 = vmatpush1.xpose.msra.mxu0 %v94
    %127 = vmatprep.subr.mxu0 0.0
    %128 = vmatpush1.xpose.msra.mxu0 0.0
    %129 = vmatprep.subr.mxu0 0.0
    %130 = vmatpush1.xpose.msra.mxu0 0.0
    %131 = vmatprep.subr.mxu0 0.0
    %132 = vmatpush1.xpose.msra.mxu0 0.0
    %133 = vmatprep.subr.mxu0 0.0
    %134 = vmatpush1.xpose.msra.mxu0 0.0
    %135 = vmatprep.subr.mxu0 0.0
    %136 = vmatpush1.xpose.msra.mxu0 0.0
    %137 = vmatprep.subr.mxu0 0.0
    %138 = vmatpush1.xpose.msra.mxu0 0.0
    %139 = vmatprep.subr.mxu0 0.0
    %140 = vmatpush1.xpose.msra.mxu0 0.0
    %141 = vmatprep.subr.mxu0 0.0
    %142 = vmatpush1.xpose.msra.mxu0 0.0
    %143 = vmatprep.subr.mxu0 0.0
    %144 = vmatpush1.xpose.msra.mxu0 0.0
    %145 = vmatprep.subr.mxu0 0.0
    %146 = vmatpush1.xpose.msra.mxu0 0.0
    %147 = vmatprep.subr.mxu0 0.0
    %148 = vmatpush1.xpose.msra.mxu0 0.0
    %149 = vmatprep.subr.mxu0 0.0
    %150 = vmatpush1.xpose.msra.mxu0 0.0
    %151 = vmatprep.subr.mxu0 0.0
    %152 = vmatpush1.xpose.msra.mxu0 0.0
    %153 = vmatprep.subr.mxu0 0.0
    %154 = vmatpush1.xpose.msra.mxu0 0.0
    %155 = vmatprep.subr.mxu0 0.0
    %156 = vmatpush1.xpose.msra.mxu0 0.0
    %157 = vmatprep.subr.mxu0 0.0
    %158 = vmatpush1.xpose.msra.mxu0 0.0
    %159 = vmatprep.mubr.f32.mxu0 0.0
    %160 = vmatmul.mubr.f32.gmra.mrb[0].mxu0 %v77
    %v161 = vpop.f32.mrb[0].mxu0
    %v162 = vadd.f32 0.0, %v161
    %v163 = vpop.f32.mrb[0].mxu0
    %164 = vmatprep.mubr.f32.mxu0 0.0
    %165 = vmatmul.mubr.f32.gmra.mrb[0].mxu0 %v78
    %v166 = vpop.f32.mrb[0].mxu0
    %v167 = vadd.f32 0.0, %v166
    %v168 = vpop.f32.mrb[0].mxu0
    %169 = vdwg.mxu0
    %s170 = sld [smem:[#allocation2]]
    %v171 = vld [vmem:[#allocation3] sm:$0xff]
    %v172 = vld [vmem:[#allocation3 + $0x8] sm:$0xff]
    %v173 = vmul.f32 %v171, %v162
    %v174 = vmul.f32 %v172, %v167
    %v175 = vld [vmem:[#allocation6] sm:$0xff]
    %v176 = vld [vmem:[#allocation6 + $0x8] sm:$0xff]
    %v177 = vmul.f32 %v175, %v162
    %v178 = vmul.f32 %v176, %v167
    %179 = vadd.xlane.f32.xlu0 %v173
    %v180 = vpop.xlane.xlu0 %179
    %181 = vadd.xlane.f32.xlu0 %v174
    %v182 = vpop.xlane.xlu0 %181
    %v183 = vstv %s170
    %v184 = vadd.f32 %v180, %v183
    %v185 = vadd.f32 %v182, %v183
    %186 = vadd.xlane.f32.xlu0 %v177
    %v187 = vpop.xlane.xlu0 %186
    %188 = vadd.xlane.f32.xlu0 %v178
    %v189 = vpop.xlane.xlu0 %188
    %v190 = vadd.f32 %v187, %v183
    %v191 = vadd.f32 %v189, %v183
    %v194 = vlaneseq
    %v195 = vand.u32 %v194, 127
    %v196 = vlaneseq
    %v197 = vshrl.u32 %v196, 7
    %v198 = vsub.s32 %v195, %v197
    %v199 = vrot.slane %v184, %v198
    %v200 = vadd.s32 %v195, 4294967288
    %v201 = vlaneseq
    %v202 = vshrl.u32 %v201, 7
    %v203 = vsub.s32 %v200, %v202
    %v204 = vrot.slane %v185, %v203
    %vm205 = vcmask 130112
    %v206 = vsel %vm205, %v204, %v199
    %vm208 = vcmask 122880
    %209 = vst.msk [vmem:[#allocation11] sm:$0x1] %vm208, %v206
    %v212 = vlaneseq
    %v213 = vshrl.u32 %v212, 7
    %v214 = vsub.s32 %v195, %v213
    %v215 = vrot.slane %v190, %v214
    %v216 = vlaneseq
    %v217 = vshrl.u32 %v216, 7
    %v218 = vsub.s32 %v200, %v217
    %v219 = vrot.slane %v191, %v218
    %v220 = vsel %vm205, %v219, %v215
    %222 = vst.msk [vmem:[#allocation11 + $0x1] sm:$0x1] %vm208, %v220
    // Predicated region
    $region38: #{tpu_custom_call.1} parent=1 // pred_check
      _
    $region39: #{tpu_custom_call.1} parent=1 // pred_check_branch
      %224 = sbr.rel (0) target = $region41
    $region40: #{tpu_custom_call.1} parent=1 // pred_region
      %s226 = ssub.s32 32, 32
      %227 = vsyncadd [#allocation5], %s226
      %s229 = sshll.u32 [#allocation11], 4
      %s230 = int_to_ptr.vmem [resolvable:$true] %s229
      %232 = dma.vmem_to_hbm [thread:$0]  %s230, 32, %s5, [#allocation5]
    $region41: #{tpu_custom_call.1} parent=1 // pred_fallthru
      _
    // Predicated region
    $region42: #{tpu_custom_call.1} parent=1 // pred_check
      _
    $region43: #{tpu_custom_call.1} parent=1 // pred_check_branch
      %234 = sbr.rel (0) target = $region45
    $region44: #{tpu_custom_call.1} parent=1 // pred_region
      %235 = dma.done [#allocation5], 32
    $region45: #{tpu_custom_call.1} parent=1 // pred_fallthru
      _
    %236 = vsyncpa [#allocation4], 1
    %237 = vsyncpa [#allocation7], 1
    %238 = vsyncpa [#allocation10], 1
    %239 = vsyncpa [#allocation5], 1

</llo_original>
